<compile_context>
chip_gen: v5e
topology: v5e:2x2
jax: 0.10.0
libtpu: 0.0.40
codegen_flags: <defaults>
</compile_context>

<pallas_src>
from itertools import permutations

import jax
import jax.numpy as jnp
import numpy as np
from jax.experimental import pallas as pl
from jax.experimental.pallas import tpu as pltpu


# ------------------------------ tiling policy --------------------------------
def _round_up(x: int, m: int) -> int:
    return ((x + m - 1) // m) * m


def _tpu_vmem_capacity_bytes() -> int:
    """Physical VMEM of the attached TPU (v7x-conservative fallback)."""
    try:
        cap = int(pltpu.get_tpu_info().vmem_capacity_bytes)
        if cap > 0:
            return cap
    except Exception:
        pass
    return 64 * 1024 * 1024


def _choose_time_tile(T: int):
    """Pick (TT, T_pad): lane-tile size and the zero-padded signal length."""
    t128 = _round_up(T, 128)
    if t128 <= 8192:
        return t128, t128
    for cand in (8192, 4096, 2048, 1024):
        padded = _round_up(T, cand)
        if padded - T <= T // 8:          # <= 12.5% padding overhead
            return cand, padded
    return 1024, _round_up(T, 1024)


def _choose_batch_tile(B: int, C: int, TT: int, itemsize: int,
                       budget_bytes: int) -> int:
    """Largest divisor of B whose per-step VMEM footprint fits the budget."""
    # Per batch row per grid step:
    #   inputs (2 arrays x double-buffered)        : 4*C*TT*itemsize
    #   matmul operand relayouts / ones-row slack  : (2*C + 4)*TT*itemsize
    per_b = (6 * C + 4) * TT * itemsize
    max_tb = max(1, budget_bytes // per_b)
    if B >= 2:                       # keep >= 2 batch grid steps (v7x: 2 TCs)
        max_tb = min(max_tb, B // 2)
    max_tb = max(1, max_tb)
    tb = 1
    for cand in range(2, B + 1):
        if cand > max_tb:
            break
        if B % cand == 0:
            tb = cand
    return tb


# -------------------------------- the kernel ---------------------------------
def _make_pairwise_si_snr_kernel(clip_value: float, total_t: int, eps: float):
    # Plain Python floats -> jaxpr literals (no captured array constants).
    clip = float(clip_value)
    eps = float(eps)
    t_f = float(total_t)
    inv_t = 1.0 / t_f
    ten_over_ln10 = float(10.0 / np.log(10.0))
    dn = (((2,), (2,)), ((0,), (0,)))   # contract time (lane) dim, batch dim 0

    def kernel(preds_ref, src_ref, out_ref,
               cross_acc, pp_acc, tt_acc, sp_acc, st_acc):
        t_idx = pl.program_id(1)

        @pl.when(t_idx == 0)
        def _init():
            cross_acc[...] = jnp.zeros_like(cross_acc)
            pp_acc[...] = jnp.zeros_like(pp_acc)
            tt_acc[...] = jnp.zeros_like(tt_acc)
            sp_acc[...] = jnp.zeros_like(sp_acc)
            st_acc[...] = jnp.zeros_like(st_acc)

        p = preds_ref[...]                       # (TB, C, TT), native dtype
        t = src_ref[...]                         # (TB, C, TT), native dtype
        tb, c, tt_len = p.shape
        ones = jnp.ones((tb, 1, tt_len), dtype=p.dtype)

        def mm(a, b):
            return jax.lax.dot_general(a, b, dn,
                                       preferred_element_type=jnp.float32)

        # Every time reduction runs on the MXU with f32 accumulation.
        cross_acc[...] += mm(p, t)               # (TB, C, C): sum_t p_i t_j
        pp_acc[...] += mm(p, p)                  # (TB, C, C): diag = sum p_i^2
        tt_acc[...] += mm(t, t)                  # (TB, C, C): diag = sum t_j^2
        sp_acc[...] += mm(p, ones)               # (TB, C, 1): sum_t p_i
        st_acc[...] += mm(ones, t)               # (TB, 1, C): sum_t t_j

        @pl.when(t_idx == pl.num_programs(1) - 1)
        def _finalize():
            # NOTE: one-pass centering (sum(x^2) - T*mean^2) in f32; for signals
            # with extreme DC offset a two-pass/compensated scheme would be more
            # robust, but this matches the torch module for audio-scale inputs.
            mp = sp_acc[...] * inv_t                        # (TB, C, 1)
            mt = st_acc[...] * inv_t                        # (TB, 1, C)
            cross = cross_acc[...] - t_f * (mp * mt)        # (TB, C, C)

            ri = jax.lax.broadcasted_iota(jnp.int32, (1, c, c), 1)
            ci = jax.lax.broadcasted_iota(jnp.int32, (1, c, c), 2)
            eye = (ri == ci).astype(jnp.float32)            # (1, C, C)
            pp = jnp.sum(pp_acc[...] * eye, axis=2, keepdims=True)  # (TB, C, 1)
            tt = jnp.sum(tt_acc[...] * eye, axis=1, keepdims=True)  # (TB, 1, C)
            pp = pp - t_f * (mp * mp)            # zero-mean ||p_i||^2
            tt = tt - t_f * (mt * mt)            # zero-mean ||t_j||^2

            scale = (cross + eps) / (tt + eps)              # (TB, C, C)
            s_tt = scale * scale * tt                       # ||scale * t_j||^2
            num = s_tt + eps
            den = s_tt - 2.0 * scale * cross + pp + eps
            val = ten_over_ln10 * jnp.log(num / den)        # 10 * log10(...)
            out_ref[...] = jnp.minimum(val, clip)           # clamp(max=clip)

    return kernel


def pairwise_si_snr(preds: jax.Array, sources: jax.Array,
                    clip_value: float, eps: float) -> jax.Array:
    """Returns V[b, i, j] = clipped si_snr(preds[b, i], sources[b, j]) (f32)."""
    B, C, T = preds.shape
    dtype = jnp.result_type(preds.dtype, sources.dtype)
    preds = preds.astype(dtype)
    sources = sources.astype(dtype)
    itemsize = jnp.dtype(dtype).itemsize

    TT, T_pad = _choose_time_tile(T)
    if T_pad != T:
        # Exact: original T is used for the means; zeros add nothing to sums.
        pad = ((0, 0), (0, 0), (0, T_pad - T))
        preds = jnp.pad(preds, pad)
        sources = jnp.pad(sources, pad)

    vmem_cap = _tpu_vmem_capacity_bytes()
    vmem_limit = (vmem_cap * 3) // 4       # ~96 MiB on v5e/v6e, ~48 MiB on v7x
    TB = _choose_batch_tile(B, C, TT, itemsize, vmem_limit // 2)

    kernel = _make_pairwise_si_snr_kernel(clip_value, T, eps)

    return pl.pallas_call(
        kernel,
        out_shape=jax.ShapeDtypeStruct((B, C, C), jnp.float32),
        grid=(B // TB, T_pad // TT),
        in_specs=[
            pl.BlockSpec((TB, C, TT), lambda b, t: (b, 0, t)),
            pl.BlockSpec((TB, C, TT), lambda b, t: (b, 0, t)),
        ],
        out_specs=pl.BlockSpec((TB, C, C), lambda b, t: (b, 0, 0)),
        scratch_shapes=[
            pltpu.VMEM((TB, C, C), jnp.float32),   # cross  = p t^T
            pltpu.VMEM((TB, C, C), jnp.float32),   # p-gram = p p^T (diag used)
            pltpu.VMEM((TB, C, C), jnp.float32),   # t-gram = t t^T (diag used)
            pltpu.VMEM((TB, C, 1), jnp.float32),   # sum(p)
            pltpu.VMEM((TB, 1, C), jnp.float32),   # sum(t)
        ],
        compiler_params=pltpu.CompilerParams(
            dimension_semantics=("parallel", "arbitrary"),
            vmem_limit_bytes=int(vmem_limit),
        ),
    )(preds, sources)


def si_snr_loss(preds: jax.Array, sources: jax.Array,
                perm_invariant: bool = True, clip_value: int = 30):
    """Mirrors SiSNRLoss.forward: returns {'loss': -target_metric}."""
    _, c_sources, _ = preds.shape
    eps = float(jnp.finfo(preds.dtype).eps)    # torch: finfo(preds.dtype).eps

    V = pairwise_si_snr(preds, sources, float(clip_value), eps)   # (B, C, C)
    row = jnp.arange(c_sources, dtype=jnp.int32)

    if perm_invariant:
        # Single gather covers all C! permutations.
        perms = jnp.asarray(list(permutations(range(c_sources))),
                            dtype=jnp.int32)                 # (P, C)
        gathered = V[:, row[None, :], perms]                 # (B, P, C)
        metrics = jnp.mean(gathered, axis=(0, 2))            # (P,)
        target_metric = jnp.max(metrics)
    else:
        target_metric = jnp.mean(V[:, row, row])

    return {"loss": -target_metric}


# --------- pure-JAX reference (faithful port of the torch module) ------------
def _si_snr_ref(preds, target, clip_value):
    eps = jnp.finfo(preds.dtype).eps
    target = target - jnp.mean(target, axis=-1, keepdims=True)
    preds = preds - jnp.mean(preds, axis=-1, keepdims=True)
    scale = (jnp.sum(preds * target, axis=-1, keepdims=True) + eps) / (
        jnp.sum(target ** 2, axis=-1, keepdims=True) + eps)
    target = target * scale
    noise = target - preds
    val = (jnp.sum(target ** 2, axis=-1) + eps) / (jnp.sum(noise ** 2, axis=-1) + eps)
    val = 10.0 * jnp.log10(val)
    val = jnp.minimum(val, clip_value)
    return val.mean()


def si_snr_loss_ref(preds, sources, perm_invariant=True, clip_value=30):
    preds = preds.astype(jnp.float32)
    sources = sources.astype(jnp.float32)
    _, c, _ = preds.shape
    if perm_invariant:
        metrics = [_si_snr_ref(preds, sources[:, list(p)], clip_value)
                   for p in permutations(range(c))]
        target = jnp.max(jnp.stack(metrics))
    else:
        target = _si_snr_ref(preds, sources, clip_value)
    return {"loss": -target}


if __name__ == "__main__":
    key = jax.random.PRNGKey(0)
    k1, k2 = jax.random.split(key, 2)

    B, C, T = 2, 3, 128  # batch, separated sources, time samples
    sources = jax.random.normal(k1, (B, C, T), dtype=jnp.float32)
    # predictions = noisy, channel-shuffled versions of the sources
    preds = sources[:, ::-1, :] + 0.3 * jax.random.normal(k2, (B, C, T), dtype=jnp.float32)

    out = si_snr_loss(preds, sources, perm_invariant=True, clip_value=30)
    loss = jax.block_until_ready(out["loss"])

    ref = si_snr_loss_ref(preds, sources, perm_invariant=True, clip_value=30)["loss"]
    np.testing.assert_allclose(np.asarray(loss), np.asarray(ref), rtol=1e-4, atol=1e-3)

    print("KERNEL_OK")
</pallas_src>

<mosaic_0001>
module attributes {stable_mosaic.version = 11 : i64} {
  func.func @kernel(%arg0: i32, %arg1: i32, %arg2: memref<1x3x128xf32, #tpu.memory_space<vmem>>, %arg3: memref<1x3x128xf32, #tpu.memory_space<vmem>>, %arg4: memref<1x3x3xf32, #tpu.memory_space<vmem>>, %arg5: memref<1x3x3xf32, #tpu.memory_space<vmem>>, %arg6: memref<1x3x3xf32, #tpu.memory_space<vmem>>, %arg7: memref<1x3x3xf32, #tpu.memory_space<vmem>>, %arg8: memref<1x3x1xf32, #tpu.memory_space<vmem>>, %arg9: memref<1x1x3xf32, #tpu.memory_space<vmem>>) attributes {dimension_semantics = [#tpu.dimension_semantics<parallel>, #tpu.dimension_semantics<arbitrary>], iteration_bounds = array<i64: 2, 1>, scalar_prefetch = 0 : i64, scratch_operands = 5 : i64, tpu.core_type = #tpu.core_type<tc>, window_params = [{transform_indices = @transform_0, window_bounds = array<i64: 1, 3, 128>}, {transform_indices = @transform_1, window_bounds = array<i64: 1, 3, 128>}, {transform_indices = @transform_2, window_bounds = array<i64: 1, 3, 3>}]} {
    %c0_i32 = arith.constant 0 : i32
    %0 = arith.cmpi eq, %arg1, %c0_i32 : i32
    %1 = arith.extui %0 : i1 to i32
    %c0_i32_0 = arith.constant 0 : i32
    %2 = arith.cmpi ne, %1, %c0_i32_0 : i32
    scf.if %2 {
      %cst_43 = arith.constant 0.000000e+00 : f32
      %29 = vector.broadcast %cst_43 : f32 to vector<1x3x3xf32>
      %c0_44 = arith.constant 0 : index
      %c0_45 = arith.constant 0 : index
      %c0_46 = arith.constant 0 : index
      %30 = vector.load %arg5[%c0_44, %c0_45, %c0_46] : memref<1x3x3xf32, #tpu.memory_space<vmem>>, vector<1x3x3xf32>
      tpu.vector_store %arg5[%c0_44, %c0_45, %c0_46], %29 {strides = array<i32>} : memref<1x3x3xf32, #tpu.memory_space<vmem>>, vector<1x3x3xf32>,
      %cst_47 = arith.constant 0.000000e+00 : f32
      %31 = vector.broadcast %cst_47 : f32 to vector<1x3x3xf32>
      %c0_48 = arith.constant 0 : index
      %c0_49 = arith.constant 0 : index
      %c0_50 = arith.constant 0 : index
      %32 = vector.load %arg6[%c0_48, %c0_49, %c0_50] : memref<1x3x3xf32, #tpu.memory_space<vmem>>, vector<1x3x3xf32>
      tpu.vector_store %arg6[%c0_48, %c0_49, %c0_50], %31 {strides = array<i32>} : memref<1x3x3xf32, #tpu.memory_space<vmem>>, vector<1x3x3xf32>,
      %cst_51 = arith.constant 0.000000e+00 : f32
      %33 = vector.broadcast %cst_51 : f32 to vector<1x3x3xf32>
      %c0_52 = arith.constant 0 : index
      %c0_53 = arith.constant 0 : index
      %c0_54 = arith.constant 0 : index
      %34 = vector.load %arg7[%c0_52, %c0_53, %c0_54] : memref<1x3x3xf32, #tpu.memory_space<vmem>>, vector<1x3x3xf32>
      tpu.vector_store %arg7[%c0_52, %c0_53, %c0_54], %33 {strides = array<i32>} : memref<1x3x3xf32, #tpu.memory_space<vmem>>, vector<1x3x3xf32>,
      %cst_55 = arith.constant 0.000000e+00 : f32
      %35 = vector.broadcast %cst_55 : f32 to vector<1x3x1xf32>
      %c0_56 = arith.constant 0 : index
      %c0_57 = arith.constant 0 : index
      %c0_58 = arith.constant 0 : index
      %36 = vector.load %arg8[%c0_56, %c0_57, %c0_58] : memref<1x3x1xf32, #tpu.memory_space<vmem>>, vector<1x3x1xf32>
      tpu.vector_store %arg8[%c0_56, %c0_57, %c0_58], %35 {strides = array<i32>} : memref<1x3x1xf32, #tpu.memory_space<vmem>>, vector<1x3x1xf32>,
      %cst_59 = arith.constant 0.000000e+00 : f32
      %37 = vector.broadcast %cst_59 : f32 to vector<1x1x3xf32>
      %c0_60 = arith.constant 0 : index
      %c0_61 = arith.constant 0 : index
      %c0_62 = arith.constant 0 : index
      %38 = vector.load %arg9[%c0_60, %c0_61, %c0_62] : memref<1x1x3xf32, #tpu.memory_space<vmem>>, vector<1x1x3xf32>
      tpu.vector_store %arg9[%c0_60, %c0_61, %c0_62], %37 {strides = array<i32>} : memref<1x1x3xf32, #tpu.memory_space<vmem>>, vector<1x1x3xf32>,
    } else {
    }
    %c0 = arith.constant 0 : index
    %c0_1 = arith.constant 0 : index
    %c0_2 = arith.constant 0 : index
    %3 = vector.load %arg2[%c0, %c0_1, %c0_2] : memref<1x3x128xf32, #tpu.memory_space<vmem>>, vector<1x3x128xf32>
    %c0_3 = arith.constant 0 : index
    %c0_4 = arith.constant 0 : index
    %c0_5 = arith.constant 0 : index
    %4 = vector.load %arg3[%c0_3, %c0_4, %c0_5] : memref<1x3x128xf32, #tpu.memory_space<vmem>>, vector<1x3x128xf32>
    %cst = arith.constant 1.000000e+00 : f32
    %5 = vector.broadcast %cst : f32 to vector<1x1x128xf32>
    %c0_6 = arith.constant 0 : index
    %c0_7 = arith.constant 0 : index
    %c0_8 = arith.constant 0 : index
    %6 = vector.load %arg5[%c0_6, %c0_7, %c0_8] : memref<1x3x3xf32, #tpu.memory_space<vmem>>, vector<1x3x3xf32>
    %cst_9 = arith.constant dense<0.000000e+00> : vector<1x3x3xf32>
    %7 = tpu.matmul %3, %4, %cst_9 {dimension_numbers = #tpu.dot_dimension_numbers<[2], [2], [1], [1], [0, 0, 0, 1, 1, 1], [0], [0]>} : vector<1x3x128xf32>, vector<1x3x128xf32>, vector<1x3x3xf32> -> vector<1x3x3xf32>
    %8 = arith.addf %6, %7 : vector<1x3x3xf32>
    %c0_10 = arith.constant 0 : index
    %c0_11 = arith.constant 0 : index
    %c0_12 = arith.constant 0 : index
    %9 = vector.load %arg5[%c0_10, %c0_11, %c0_12] : memref<1x3x3xf32, #tpu.memory_space<vmem>>, vector<1x3x3xf32>
    tpu.vector_store %arg5[%c0_10, %c0_11, %c0_12], %8 {strides = array<i32>} : memref<1x3x3xf32, #tpu.memory_space<vmem>>, vector<1x3x3xf32>,
    %c0_13 = arith.constant 0 : index
    %c0_14 = arith.constant 0 : index
    %c0_15 = arith.constant 0 : index
    %10 = vector.load %arg6[%c0_13, %c0_14, %c0_15] : memref<1x3x3xf32, #tpu.memory_space<vmem>>, vector<1x3x3xf32>
    %cst_16 = arith.constant dense<0.000000e+00> : vector<1x3x3xf32>
    %11 = tpu.matmul %3, %3, %cst_16 {dimension_numbers = #tpu.dot_dimension_numbers<[2], [2], [1], [1], [0, 0, 0, 1, 1, 1], [0], [0]>} : vector<1x3x128xf32>, vector<1x3x128xf32>, vector<1x3x3xf32> -> vector<1x3x3xf32>
    %12 = arith.addf %10, %11 : vector<1x3x3xf32>
    %c0_17 = arith.constant 0 : index
    %c0_18 = arith.constant 0 : index
    %c0_19 = arith.constant 0 : index
    %13 = vector.load %arg6[%c0_17, %c0_18, %c0_19] : memref<1x3x3xf32, #tpu.memory_space<vmem>>, vector<1x3x3xf32>
    tpu.vector_store %arg6[%c0_17, %c0_18, %c0_19], %12 {strides = array<i32>} : memref<1x3x3xf32, #tpu.memory_space<vmem>>, vector<1x3x3xf32>,
    %c0_20 = arith.constant 0 : index
    %c0_21 = arith.constant 0 : index
    %c0_22 = arith.constant 0 : index
    %14 = vector.load %arg7[%c0_20, %c0_21, %c0_22] : memref<1x3x3xf32, #tpu.memory_space<vmem>>, vector<1x3x3xf32>
    %cst_23 = arith.constant dense<0.000000e+00> : vector<1x3x3xf32>
    %15 = tpu.matmul %4, %4, %cst_23 {dimension_numbers = #tpu.dot_dimension_numbers<[2], [2], [1], [1], [0, 0, 0, 1, 1, 1], [0], [0]>} : vector<1x3x128xf32>, vector<1x3x128xf32>, vector<1x3x3xf32> -> vector<1x3x3xf32>
    %16 = arith.addf %14, %15 : vector<1x3x3xf32>
    %c0_24 = arith.constant 0 : index
    %c0_25 = arith.constant 0 : index
    %c0_26 = arith.constant 0 : index
    %17 = vector.load %arg7[%c0_24, %c0_25, %c0_26] : memref<1x3x3xf32, #tpu.memory_space<vmem>>, vector<1x3x3xf32>
    tpu.vector_store %arg7[%c0_24, %c0_25, %c0_26], %16 {strides = array<i32>} : memref<1x3x3xf32, #tpu.memory_space<vmem>>, vector<1x3x3xf32>,
    %c0_27 = arith.constant 0 : index
    %c0_28 = arith.constant 0 : index
    %c0_29 = arith.constant 0 : index
    %18 = vector.load %arg8[%c0_27, %c0_28, %c0_29] : memref<1x3x1xf32, #tpu.memory_space<vmem>>, vector<1x3x1xf32>
    %cst_30 = arith.constant dense<0.000000e+00> : vector<1x3x1xf32>
    %19 = tpu.matmul %3, %5, %cst_30 {dimension_numbers = #tpu.dot_dimension_numbers<[2], [2], [1], [1], [0, 0, 0, 1, 1, 1], [0], [0]>} : vector<1x3x128xf32>, vector<1x1x128xf32>, vector<1x3x1xf32> -> vector<1x3x1xf32>
    %20 = arith.addf %18, %19 : vector<1x3x1xf32>
    %c0_31 = arith.constant 0 : index
    %c0_32 = arith.constant 0 : index
    %c0_33 = arith.constant 0 : index
    %21 = vector.load %arg8[%c0_31, %c0_32, %c0_33] : memref<1x3x1xf32, #tpu.memory_space<vmem>>, vector<1x3x1xf32>
    tpu.vector_store %arg8[%c0_31, %c0_32, %c0_33], %20 {strides = array<i32>} : memref<1x3x1xf32, #tpu.memory_space<vmem>>, vector<1x3x1xf32>,
    %c0_34 = arith.constant 0 : index
    %c0_35 = arith.constant 0 : index
    %c0_36 = arith.constant 0 : index
    %22 = vector.load %arg9[%c0_34, %c0_35, %c0_36] : memref<1x1x3xf32, #tpu.memory_space<vmem>>, vector<1x1x3xf32>
    %cst_37 = arith.constant dense<0.000000e+00> : vector<1x1x3xf32>
    %23 = tpu.matmul %5, %4, %cst_37 {dimension_numbers = #tpu.dot_dimension_numbers<[2], [2], [1], [1], [0, 0, 0, 1, 1, 1], [0], [0]>} : vector<1x1x128xf32>, vector<1x3x128xf32>, vector<1x1x3xf32> -> vector<1x1x3xf32>
    %24 = arith.addf %22, %23 : vector<1x1x3xf32>
    %c0_38 = arith.constant 0 : index
    %c0_39 = arith.constant 0 : index
    %c0_40 = arith.constant 0 : index
    %25 = vector.load %arg9[%c0_38, %c0_39, %c0_40] : memref<1x1x3xf32, #tpu.memory_space<vmem>>, vector<1x1x3xf32>
    tpu.vector_store %arg9[%c0_38, %c0_39, %c0_40], %24 {strides = array<i32>} : memref<1x1x3xf32, #tpu.memory_space<vmem>>, vector<1x1x3xf32>,
    %c0_i32_41 = arith.constant 0 : i32
    %26 = arith.cmpi eq, %arg1, %c0_i32_41 : i32
    %27 = arith.extui %26 : i1 to i32
    %c0_i32_42 = arith.constant 0 : i32
    %28 = arith.cmpi ne, %27, %c0_i32_42 : i32
    scf.if %28 {
      %c0_43 = arith.constant 0 : index
      %c0_44 = arith.constant 0 : index
      %c0_45 = arith.constant 0 : index
      %29 = vector.load %arg8[%c0_43, %c0_44, %c0_45] : memref<1x3x1xf32, #tpu.memory_space<vmem>>, vector<1x3x1xf32>
      %cst_46 = arith.constant 7.812500e-03 : f32
      %30 = vector.broadcast %cst_46 : f32 to vector<1x3x1xf32>
      %31 = arith.mulf %29, %30 : vector<1x3x1xf32>
      %c0_47 = arith.constant 0 : index
      %c0_48 = arith.constant 0 : index
      %c0_49 = arith.constant 0 : index
      %32 = vector.load %arg9[%c0_47, %c0_48, %c0_49] : memref<1x1x3xf32, #tpu.memory_space<vmem>>, vector<1x1x3xf32>
      %cst_50 = arith.constant 7.812500e-03 : f32
      %33 = vector.broadcast %cst_50 : f32 to vector<1x1x3xf32>
      %34 = arith.mulf %32, %33 : vector<1x1x3xf32>
      %c0_51 = arith.constant 0 : index
      %c0_52 = arith.constant 0 : index
      %c0_53 = arith.constant 0 : index
      %35 = vector.load %arg5[%c0_51, %c0_52, %c0_53] : memref<1x3x3xf32, #tpu.memory_space<vmem>>, vector<1x3x3xf32>
      %36 = vector.broadcast %31 : vector<1x3x1xf32> to vector<1x3x3xf32>
      %37 = vector.broadcast %34 : vector<1x1x3xf32> to vector<1x3x3xf32>
      %38 = arith.mulf %36, %37 : vector<1x3x3xf32>
      %cst_54 = arith.constant 1.280000e+02 : f32
      %39 = vector.broadcast %cst_54 : f32 to vector<1x3x3xf32>
      %40 = arith.mulf %39, %38 : vector<1x3x3xf32>
      %41 = arith.subf %35, %40 : vector<1x3x3xf32>
      %42 = tpu.iota {dimensions = array<i32: 1>} : vector<1x3x3xi32>
      %43 = tpu.iota {dimensions = array<i32: 2>} : vector<1x3x3xi32>
      %44 = arith.cmpi eq, %42, %43 : vector<1x3x3xi32>
      %45 = arith.extui %44 : vector<1x3x3xi1> to vector<1x3x3xi32>
      %46 = arith.sitofp %45 : vector<1x3x3xi32> to vector<1x3x3xf32>
      %c0_55 = arith.constant 0 : index
      %c0_56 = arith.constant 0 : index
      %c0_57 = arith.constant 0 : index
      %47 = vector.load %arg6[%c0_55, %c0_56, %c0_57] : memref<1x3x3xf32, #tpu.memory_space<vmem>>, vector<1x3x3xf32>
      %48 = arith.mulf %47, %46 : vector<1x3x3xf32>
      %cst_58 = arith.constant dense<0.000000e+00> : vector<1x3xf32>
      %49 = vector.multi_reduction <add>, %48, %cst_58 [2] : vector<1x3x3xf32> to vector<1x3xf32>
      %50 = vector.shape_cast %49 : vector<1x3xf32> to vector<1x3x1xf32>
      %c0_59 = arith.constant 0 : index
      %c0_60 = arith.constant 0 : index
      %c0_61 = arith.constant 0 : index
      %51 = vector.load %arg7[%c0_59, %c0_60, %c0_61] : memref<1x3x3xf32, #tpu.memory_space<vmem>>, vector<1x3x3xf32>
      %52 = arith.mulf %51, %46 : vector<1x3x3xf32>
      %cst_62 = arith.constant dense<0.000000e+00> : vector<1x3xf32>
      %53 = vector.multi_reduction <add>, %52, %cst_62 [1] : vector<1x3x3xf32> to vector<1x3xf32>
      %54 = vector.shape_cast %53 : vector<1x3xf32> to vector<1x1x3xf32>
      %55 = arith.mulf %31, %31 : vector<1x3x1xf32>
      %cst_63 = arith.constant 1.280000e+02 : f32
      %56 = vector.broadcast %cst_63 : f32 to vector<1x3x1xf32>
      %57 = arith.mulf %56, %55 : vector<1x3x1xf32>
      %58 = arith.subf %50, %57 : vector<1x3x1xf32>
      %59 = arith.mulf %34, %34 : vector<1x1x3xf32>
      %cst_64 = arith.constant 1.280000e+02 : f32
      %60 = vector.broadcast %cst_64 : f32 to vector<1x1x3xf32>
      %61 = arith.mulf %60, %59 : vector<1x1x3xf32>
      %62 = arith.subf %54, %61 : vector<1x1x3xf32>
      %cst_65 = arith.constant 1.1920929E-7 : f32
      %63 = vector.broadcast %cst_65 : f32 to vector<1x3x3xf32>
      %64 = arith.addf %41, %63 : vector<1x3x3xf32>
      %cst_66 = arith.constant 1.1920929E-7 : f32
      %65 = vector.broadcast %cst_66 : f32 to vector<1x1x3xf32>
      %66 = arith.addf %62, %65 : vector<1x1x3xf32>
      %67 = vector.broadcast %66 : vector<1x1x3xf32> to vector<1x3x3xf32>
      %68 = arith.divf %64, %67 : vector<1x3x3xf32>
      %69 = arith.mulf %68, %68 : vector<1x3x3xf32>
      %70 = vector.broadcast %62 : vector<1x1x3xf32> to vector<1x3x3xf32>
      %71 = arith.mulf %69, %70 : vector<1x3x3xf32>
      %cst_67 = arith.constant 1.1920929E-7 : f32
      %72 = vector.broadcast %cst_67 : f32 to vector<1x3x3xf32>
      %73 = arith.addf %71, %72 : vector<1x3x3xf32>
      %cst_68 = arith.constant 2.000000e+00 : f32
      %74 = vector.broadcast %cst_68 : f32 to vector<1x3x3xf32>
      %75 = arith.mulf %74, %68 : vector<1x3x3xf32>
      %76 = arith.mulf %75, %41 : vector<1x3x3xf32>
      %77 = arith.subf %71, %76 : vector<1x3x3xf32>
      %78 = vector.broadcast %58 : vector<1x3x1xf32> to vector<1x3x3xf32>
      %79 = arith.addf %77, %78 : vector<1x3x3xf32>
      %cst_69 = arith.constant 1.1920929E-7 : f32
      %80 = vector.broadcast %cst_69 : f32 to vector<1x3x3xf32>
      %81 = arith.addf %79, %80 : vector<1x3x3xf32>
      %82 = arith.divf %73, %81 : vector<1x3x3xf32>
      %83 = math.log %82 : vector<1x3x3xf32>
      %cst_70 = arith.constant 4.34294462 : f32
      %84 = vector.broadcast %cst_70 : f32 to vector<1x3x3xf32>
      %85 = arith.mulf %84, %83 : vector<1x3x3xf32>
      %cst_71 = arith.constant 3.000000e+01 : f32
      %86 = vector.broadcast %cst_71 : f32 to vector<1x3x3xf32>
      %87 = arith.minimumf %85, %86 : vector<1x3x3xf32>
      %c0_72 = arith.constant 0 : index
      %c0_73 = arith.constant 0 : index
      %c0_74 = arith.constant 0 : index
      %88 = vector.load %arg4[%c0_72, %c0_73, %c0_74] : memref<1x3x3xf32, #tpu.memory_space<vmem>>, vector<1x3x3xf32>
      tpu.vector_store %arg4[%c0_72, %c0_73, %c0_74], %87 {strides = array<i32>} : memref<1x3x3xf32, #tpu.memory_space<vmem>>, vector<1x3x3xf32>,
    } else {
    }
    return
  }
  func.func @transform_0(%arg0: i32, %arg1: i32) -> (i32, i32, i32) {
    %c0_i32 = arith.constant 0 : i32
    %c0_i32_0 = arith.constant 0 : i32
    return %arg0, %c0_i32, %arg1 : i32, i32, i32
  }
  func.func @transform_1(%arg0: i32, %arg1: i32) -> (i32, i32, i32) {
    %c0_i32 = arith.constant 0 : i32
    %c0_i32_0 = arith.constant 0 : i32
    return %arg0, %c0_i32, %arg1 : i32, i32, i32
  }
  func.func @transform_2(%arg0: i32, %arg1: i32) -> (i32, i32, i32) {
    %c0_i32 = arith.constant 0 : i32
    %c0_i32_0 = arith.constant 0 : i32
    %c0_i32_1 = arith.constant 0 : i32
    return %arg0, %c0_i32, %c0_i32_0 : i32, i32, i32
  }
}

</mosaic_0001>

<llo_original>
// kernel: tpu_custom_call.1
$region0: #{tpu_custom_call.1}
  #allocation0 [shape = 'u32[]', space=smem, size = 0x4, offset = 0x4, fixed_abs, tag = 'smem constant byte address 0x4 - core index']
  #allocation1 [shape = 'u32[72,128]{1,0:T(1,128)}', space=vmem, size = 0x9000, scoped, tag = 'internal scratch']
  #allocation2 [shape = 'f32[1,3,3]{2,1,0:T(4,128)}', space=vmem, size = 0x800, scoped, tag = 'scratch operand']
  #allocation3 [shape = 'f32[1,3,3]{2,1,0:T(4,128)}', space=vmem, size = 0x800, scoped, tag = 'scratch operand']
  #allocation4 [shape = 'f32[1,3,3]{2,1,0:T(4,128)}', space=vmem, size = 0x800, scoped, tag = 'scratch operand']
  #allocation5 [shape = 'f32[1,3,1]{2,1,0:T(4,128)}', space=vmem, size = 0x800, scoped, tag = 'scratch operand']
  #allocation6 [shape = 'f32[1,1,3]{2,1,0:T(1,128)}', space=vmem, size = 0x200, scoped, tag = 'scratch operand']
  %s0 = inlined_call_operand.vmem [shape: f32[2,3,128], index: 0, kind: input, shape index: {}]
  %s1 = inlined_call_operand.vmem [shape: f32[2,3,128], index: 1, kind: input, shape index: {}]
  %s2 = inlined_call_operand.vmem [shape: f32[2,3,3], index: 2, kind: output, shape index: {}]
  %s3 = sld [smem:[#allocation0]]
  $region49: #{tpu_custom_call.1} parent=0
    _
  %s5 = ssub.s32 1, %s3
  %s6 = scalar_select 0, %s5, %s3
  loop: start=0, step=1, limit=4
  $region2: #{tpu_custom_call.1} parent=0 // loop_pre_header
    _
  $region3: #{tpu_custom_call.1} parent=0 // loop_header
    %s8 = sphi 0, %s12
    %p9 = scmp.ge.s32.totalorder %s8, 4
    %s15 = sphi 0, %s27
    %s16 = sphi 0, %s23
    %s17 = sphi 0, %s15
    %s18 = sphi 0, %s16
    %s19 = sphi 0, %s17
    %s20 = sphi 0, %s18
    %s32 = sphi 0, %s34
    %s35 = sphi 0, %s32
    %s36 = sphi 0, %s35
    %s52 = sphi 0, %s36
    %s60 = sphi 0, %s62
    %s63 = sphi 0, %s60
    %s64 = sphi 0, %s63
    %s80 = sphi 0, %s64
    %s86 = sphi 0, %s88
    %s89 = sphi 0, %s86
    %s90 = sphi 0, %s89
    %s106 = sphi 0, %s90
  $region4: #{tpu_custom_call.1} parent=0 // loop_header_branch
    %11 = sbr.rel (%p9) target = $region8
  $region5: #{tpu_custom_call.1} parent=0 // loop_body
    %s13 = ssub.s32 %s8, 1
    %s14 = ssub.s32 %s8, 2
    %s21 = sadd.s32 1, %s16
    %p22 = scmp.ge.s32.totalorder %s21, 1
    %s23 = scalar_select %p22, 0, %s21
    %s24 = sadd.s32 1, %s15
    %s25 = scalar_select %p22, %s24, %s15
    %p26 = scmp.ge.s32.totalorder %s25, 2
    %s27 = scalar_select %p26, 0, %s25
    %s28 = ssub.s32 %s15, %s27
    %s29 = ssub.s32 %s16, %s23
    %s30 = sor.u32 %s28, %s29
    %p31 = scmp.eq.s32.totalorder %s30, 0
    %s33 = sadd.s32 %s32, 1
    %s34 = scalar_select %p31, %s32, %s33
    %p37 = pneg %p31
    %p38 = scmp.eq.s32.totalorder %s8, 1
    %p39 = por %p37, %p38
    %p40 = scmp.ne.s32.totalorder %s32, %s35
    %p41 = scmp.eq.s32.totalorder %s8, 0
    %p42 = por %p40, %p41
    %p43 = scmp.ne.s32.totalorder %s32, %s35
    %p44 = scmp.eq.s32.totalorder %s13, 1
    %p45 = por %p43, %p44
    %p46 = scmp.ne.s32.totalorder %s35, %s36
    %p47 = scmp.eq.s32.totalorder %s13, 0
    %p48 = por %p46, %p47
    %p49 = scmp.ne.s32.totalorder %s35, %s36
    %p50 = scmp.eq.s32.totalorder %s14, 1
    %p51 = por %p49, %p50
    %p53 = scmp.ne.s32.totalorder %s36, %s52
    %p54 = scmp.eq.s32.totalorder %s14, 0
    %p55 = por %p53, %p54
    %s56 = ssub.s32 %s15, %s27
    %s57 = ssub.s32 %s16, %s23
    %s58 = sor.u32 %s56, %s57
    %p59 = scmp.eq.s32.totalorder %s58, 0
    %s61 = sadd.s32 %s60, 1
    %s62 = scalar_select %p59, %s60, %s61
    %p65 = pneg %p59
    %p66 = scmp.eq.s32.totalorder %s8, 1
    %p67 = por %p65, %p66
    %p68 = scmp.ne.s32.totalorder %s60, %s63
    %p69 = scmp.eq.s32.totalorder %s8, 0
    %p70 = por %p68, %p69
    %p71 = scmp.ne.s32.totalorder %s60, %s63
    %p72 = scmp.eq.s32.totalorder %s13, 1
    %p73 = por %p71, %p72
    %p74 = scmp.ne.s32.totalorder %s63, %s64
    %p75 = scmp.eq.s32.totalorder %s13, 0
    %p76 = por %p74, %p75
    %p77 = scmp.ne.s32.totalorder %s63, %s64
    %p78 = scmp.eq.s32.totalorder %s14, 1
    %p79 = por %p77, %p78
    %p81 = scmp.ne.s32.totalorder %s64, %s80
    %p82 = scmp.eq.s32.totalorder %s14, 0
    %p83 = por %p81, %p82
    %s84 = ssub.s32 %s15, %s27
    %p85 = scmp.eq.s32.totalorder %s84, 0
    %s87 = sadd.s32 %s86, 1
    %s88 = scalar_select %p85, %s86, %s87
    %p91 = pneg %p85
    %p92 = scmp.eq.s32.totalorder %s8, 1
    %p93 = por %p91, %p92
    %p94 = scmp.ne.s32.totalorder %s86, %s89
    %p95 = scmp.eq.s32.totalorder %s8, 0
    %p96 = por %p94, %p95
    %p97 = scmp.ne.s32.totalorder %s86, %s89
    %p98 = scmp.eq.s32.totalorder %s13, 1
    %p99 = por %p97, %p98
    %p100 = scmp.ne.s32.totalorder %s89, %s90
    %p101 = scmp.eq.s32.totalorder %s13, 0
    %p102 = por %p100, %p101
    %p103 = scmp.ne.s32.totalorder %s89, %s90
    %p104 = scmp.eq.s32.totalorder %s14, 1
    %p105 = por %p103, %p104
    %p107 = scmp.ne.s32.totalorder %s90, %s106
    %p108 = scmp.eq.s32.totalorder %s14, 0
    %p109 = por %p107, %p108
    %p110 = scmp.le.s32.totalorder 1, %s8
    %p111 = scmp.lt.s32.totalorder %s8, 3
    %p112 = pnand %p110, %p111
    %p113 = pneg %p112
    // Predicated region
    $region9: #{tpu_custom_call.1} parent=5 // pred_check
      _
    $region10: #{tpu_custom_call.1} parent=5 // pred_check_branch
      %115 = sbr.rel (%p112) target = $region12
    $region11: #{tpu_custom_call.1} parent=5 // pred_region
      %s116 = ssub.s32 %s8, 1
    $region12: #{tpu_custom_call.1} parent=5 // pred_fallthru
      _
    %p117 = scmp.lt.s32.totalorder %s8, 2
    // Predicated region
    $region13: #{tpu_custom_call.1} parent=5 // pred_check
      %p118 = pneg %p117
    $region14: #{tpu_custom_call.1} parent=5 // pred_check_branch
      %120 = sbr.rel (%p118) target = $region16
    $region15: #{tpu_custom_call.1} parent=5 // pred_region
      // Predicated region
      $region17: #{tpu_custom_call.1} parent=15 // pred_check
        %p121 = pneg %p42
      $region18: #{tpu_custom_call.1} parent=15 // pred_check_branch
        %123 = sbr.rel (%p121) target = $region20
      $region19: #{tpu_custom_call.1} parent=15 // pred_region
        %p124 = scmp.lt.s32.totalorder %s15, 1
        %s125 = scalar_select %p124, %s15, 1
        %p126 = scmp.lt.s32.totalorder %s16, 0
        %s127 = scalar_select %p126, %s16, 0
        %s128 = sadd.s32 %s127, %s125
        %s129 = smul.addr %s128, 4
        %s130 = scalar_lea.vmem %s0, %s129
      $region20: #{tpu_custom_call.1} parent=15 // pred_fallthru
        _
      // Predicated region
      $region21: #{tpu_custom_call.1} parent=15 // pred_check
        %p131 = pneg %p70
      $region22: #{tpu_custom_call.1} parent=15 // pred_check_branch
        %133 = sbr.rel (%p131) target = $region24
      $region23: #{tpu_custom_call.1} parent=15 // pred_region
        %p134 = scmp.lt.s32.totalorder %s15, 1
        %s135 = scalar_select %p134, %s15, 1
        %p136 = scmp.lt.s32.totalorder %s16, 0
        %s137 = scalar_select %p136, %s16, 0
        %s138 = sadd.s32 %s137, %s135
        %s139 = smul.addr %s138, 4
        %s140 = scalar_lea.vmem %s1, %s139
      $region24: #{tpu_custom_call.1} parent=15 // pred_fallthru
        _
    $region16: #{tpu_custom_call.1} parent=5 // pred_fallthru
      _
    %p141 = scmp.le.s32.totalorder 1, %s8
    %p142 = scmp.lt.s32.totalorder %s8, 3
    %p143 = pnand %p141, %p142
    %p144 = pneg %p143
    // Predicated region
    $region25: #{tpu_custom_call.1} parent=5 // pred_check
      _
    $region26: #{tpu_custom_call.1} parent=5 // pred_check_branch
      %146 = sbr.rel (%p143) target = $region28
    $region27: #{tpu_custom_call.1} parent=5 // pred_region
      %s147 = ssub.s32 %s8, 1
      %p148 = scmp.lt.s32.totalorder %s17, 1
      %s149 = scalar_select %p148, %s17, 1
      %p150 = scmp.lt.s32.totalorder %s18, 0
      %s151 = scalar_select %p150, %s18, 0
      %s152 = sadd.s32 %s151, %s149
      %s153 = smul.addr %s152, 4
      %s154 = scalar_lea.vmem %s0, %s153
      %p155 = pneg %p48
      %p156 = pneg %p45
      %p157 = scmp.lt.s32.totalorder %s17, 1
      %s158 = scalar_select %p157, %s17, 1
      %p159 = scmp.lt.s32.totalorder %s18, 0
      %s160 = scalar_select %p159, %s18, 0
      %s161 = sadd.s32 %s160, %s158
      %s162 = smul.addr %s161, 4
      %s163 = scalar_lea.vmem %s1, %s162
      %p164 = pneg %p76
      %p165 = pneg %p73
      %p166 = pneg %p102
      %p167 = pneg %p99
      %p168 = scmp.lt.s32.totalorder %s17, 1
      %s169 = scalar_select %p168, %s17, 1
      %s170 = smul.addr %s169, 4
      %s171 = scalar_lea.vmem %s2, %s170
      %p172 = scmp.lt.s32.totalorder %s17, 1
      %s173 = scalar_select %p172, %s17, 1
      %p174 = scmp.lt.s32.totalorder %s18, 0
      %s175 = scalar_select %p174, %s18, 0
      %s176 = sadd.s32 %s175, %s173
      %s177 = smul.addr %s176, 4
      %s178 = scalar_lea.vmem %s0, %s177
      %p179 = scmp.lt.s32.totalorder %s17, 1
      %s180 = scalar_select %p179, %s17, 1
      %p181 = scmp.lt.s32.totalorder %s18, 0
      %s182 = scalar_select %p181, %s18, 0
      %s183 = sadd.s32 %s182, %s180
      %s184 = smul.addr %s183, 4
      %s185 = scalar_lea.vmem %s1, %s184
      %p186 = scmp.lt.s32.totalorder %s17, 1
      %s187 = scalar_select %p186, %s17, 1
      %s188 = smul.addr %s187, 4
      %s189 = scalar_lea.vmem %s2, %s188
      %p190 = scmp.eq.s32.totalorder %s18, 0
      // Predicated region
      $region29: #{tpu_custom_call.1} parent=27 // pred_check
        %p191 = pneg %p190
      $region30: #{tpu_custom_call.1} parent=27 // pred_check_branch
        %193 = sbr.rel (%p191) target = $region32
      $region31: #{tpu_custom_call.1} parent=27 // pred_region
        %vm194 = vcmask 18432
        %195 = vst.msk [vmem:[#allocation2] sm:$0x7] %vm194, 0.0
        %196 = vst.msk [vmem:[#allocation3] sm:$0x7] %vm194, 0.0
        %197 = vst.msk [vmem:[#allocation4] sm:$0x7] %vm194, 0.0
        %vm198 = vcmask 2048
        %199 = vst.msk [vmem:[#allocation5] sm:$0x7] %vm198, 0.0
        %vm200 = vcmask 16384
        %201 = vst.msk [vmem:[#allocation6] sm:$0x1] %vm200, 0.0
      $region32: #{tpu_custom_call.1} parent=27 // pred_fallthru
        _
      %v202 = vld [vmem:[%s178] sm:$0x7]
      %v203 = vld [vmem:[%s185] sm:$0x7]
      %v204 = vld [vmem:[#allocation2] sm:$0x7]
      %205 = vmatpush.xpose.msra.mxu0 0.0
      %206 = vmatpush.xpose.msra.mxu0 0.0
      %207 = vmatpush.xpose.msra.mxu0 0.0
      %208 = vmatpush.xpose.msra.mxu0 0.0
      %209 = vmatpush.xpose.msra.mxu0 0.0
      %210 = vmatpush.xpose.msra.mxu0 0.0
      %211 = vmatpush.xpose.msra.mxu0 0.0
      %212 = vmatpush.xpose.msra.mxu0 0.0
      %213 = vmatpush.xpose.msra.mxu0 0.0
      %214 = vmatpush.xpose.msra.mxu0 0.0
      %215 = vmatpush.xpose.msra.mxu0 0.0
      %216 = vmatpush.xpose.msra.mxu0 0.0
      %217 = vmatpush.xpose.msra.mxu0 0.0
      %218 = vmatpush.xpose.msra.mxu0 0.0
      %219 = vmatpush.xpose.msra.mxu0 0.0
      %220 = vmatpush.xpose.msra.mxu0 %v203
      %221 = vmatmul.f32.gmra.mxu0 %v202
      %v222 = vpop.f32.mrf.mxu0
      %v223 = vadd.f32 0.0, %v222
      %224 = vdwg.mxu0
      %v225 = vadd.f32 %v204, %v223
      %vm226 = vcmask 18432
      %227 = vst.msk [vmem:[#allocation2] sm:$0x7] %vm226, %v225
      %v228 = vld [vmem:[#allocation3] sm:$0x7]
      %229 = vmatpush.xpose.msra.mxu0 0.0
      %230 = vmatpush.xpose.msra.mxu0 0.0
      %231 = vmatpush.xpose.msra.mxu0 0.0
      %232 = vmatpush.xpose.msra.mxu0 0.0
      %233 = vmatpush.xpose.msra.mxu0 0.0
      %234 = vmatpush.xpose.msra.mxu0 0.0
      %235 = vmatpush.xpose.msra.mxu0 0.0
      %236 = vmatpush.xpose.msra.mxu0 0.0
      %237 = vmatpush.xpose.msra.mxu0 0.0
      %238 = vmatpush.xpose.msra.mxu0 0.0
      %239 = vmatpush.xpose.msra.mxu0 0.0
      %240 = vmatpush.xpose.msra.mxu0 0.0
      %241 = vmatpush.xpose.msra.mxu0 0.0
      %242 = vmatpush.xpose.msra.mxu0 0.0
      %243 = vmatpush.xpose.msra.mxu0 0.0
      %244 = vmatpush.xpose.msra.mxu0 %v202
      %245 = vmatmul.f32.gmra.mxu0 %v202
      %v246 = vpop.f32.mrf.mxu0
      %v247 = vadd.f32 0.0, %v246
      %248 = vdwg.mxu0
      %v249 = vadd.f32 %v228, %v247
      %250 = vst.msk [vmem:[#allocation3] sm:$0x7] %vm226, %v249
      %v251 = vld [vmem:[#allocation4] sm:$0x7]
      %252 = vmatpush.xpose.msra.mxu0 0.0
      %253 = vmatpush.xpose.msra.mxu0 0.0
      %254 = vmatpush.xpose.msra.mxu0 0.0
      %255 = vmatpush.xpose.msra.mxu0 0.0
      %256 = vmatpush.xpose.msra.mxu0 0.0
      %257 = vmatpush.xpose.msra.mxu0 0.0
      %258 = vmatpush.xpose.msra.mxu0 0.0
      %259 = vmatpush.xpose.msra.mxu0 0.0
      %260 = vmatpush.xpose.msra.mxu0 0.0
      %261 = vmatpush.xpose.msra.mxu0 0.0
      %262 = vmatpush.xpose.msra.mxu0 0.0
      %263 = vmatpush.xpose.msra.mxu0 0.0
      %264 = vmatpush.xpose.msra.mxu0 0.0
      %265 = vmatpush.xpose.msra.mxu0 0.0
      %266 = vmatpush.xpose.msra.mxu0 0.0
      %267 = vmatpush.xpose.msra.mxu0 %v203
      %268 = vmatmul.f32.gmra.mxu0 %v203
      %v269 = vpop.f32.mrf.mxu0
      %v270 = vadd.f32 0.0, %v269
      %271 = vdwg.mxu0
      %v272 = vadd.f32 %v251, %v270
      %273 = vst.msk [vmem:[#allocation4] sm:$0x7] %vm226, %v272
      %v274 = vld [vmem:[#allocation5] sm:$0x7]
      %vm275 = vcmask 1042432
      %v276 = vsel %vm275, %v202, 0.0
      %277 = vadd.xlane.f32.xlu0 %v276
      %v278 = vpop.xlane.xlu0 %277
      %v279 = vadd.f32 %v274, %v278
      %vm280 = vcmask 2048
      %281 = vst.msk [vmem:[#allocation5] sm:$0x7] %vm280, %v279
      %v282 = vld [vmem:[#allocation6] sm:$0x1]
      %283 = vmatpush.xpose.msra.mxu0 0.0
      %284 = vmatpush.xpose.msra.mxu0 0.0
      %285 = vmatpush.xpose.msra.mxu0 0.0
      %286 = vmatpush.xpose.msra.mxu0 0.0
      %287 = vmatpush.xpose.msra.mxu0 0.0
      %288 = vmatpush.xpose.msra.mxu0 0.0
      %289 = vmatpush.xpose.msra.mxu0 0.0
      %290 = vmatpush.xpose.msra.mxu0 0.0
      %291 = vmatpush.xpose.msra.mxu0 0.0
      %292 = vmatpush.xpose.msra.mxu0 0.0
      %293 = vmatpush.xpose.msra.mxu0 0.0
      %294 = vmatpush.xpose.msra.mxu0 0.0
      %295 = vmatpush.xpose.msra.mxu0 0.0
      %296 = vmatpush.xpose.msra.mxu0 0.0
      %297 = vmatpush.xpose.msra.mxu0 0.0
      %298 = vmatpush.xpose.msra.mxu0 %v203
      %299 = vmatmul.f32.gmra.mxu0 1.0
      %v300 = vpop.f32.mrf.mxu0
      %v301 = vadd.f32 0.0, %v300
      %302 = vdwg.mxu0
      %v303 = vadd.f32 %v282, %v301
      %vm304 = vcmask 16384
      %305 = vst.msk [vmem:[#allocation6] sm:$0x1] %vm304, %v303
      // Predicated region
      $region33: #{tpu_custom_call.1} parent=27 // pred_check
        %p306 = pneg %p190
      $region34: #{tpu_custom_call.1} parent=27 // pred_check_branch
        %308 = sbr.rel (%p306) target = $region36
      $region35: #{tpu_custom_call.1} parent=27 // pred_region
        %v309 = vld [vmem:[#allocation5] sm:$0x7]
        %v310 = vmul.f32 %v309, 0.0078125
        %v311 = vld [vmem:[#allocation6] sm:$0x1]
        %v312 = vmul.f32 %v311, 0.0078125
        %v313 = vld [vmem:[#allocation2] sm:$0x7]
        %315 = vset.pattern.permute.xlu0 0
        %316 = vperm.xlu0 %315, %v310
        %v317 = vpop.permute.xlu0 %316
        %v320 = vperm.slane %v312, 0
        %v322 = vmul.f32 %v317, %v320
        %v323 = vmul.f32 %v322, 128.0
        %v324 = vsub.f32 %v313, %v323
        %v325 = vlaneseq
        %v326 = vshrl.u32 %v325, 7
        %v327 = vlaneseq
        %v328 = vand.u32 %v327, 127
        %vm329 = vcmp.eq.s32.totalorder %v326, %v328
        %v330 = vsel %vm329, 1, 0
        %v331 = vcvt.s32.f32 %v330
        %v332 = vld [vmem:[#allocation3] sm:$0x7]
        %v333 = vmul.f32 %v332, %v331
        %v334 = vsel %vm226, %v333, 0.0
        %335 = vadd.xlane.f32.xlu0 %v334
        %v336 = vpop.xlane.xlu0 %335
        %v337 = vld [vmem:[#allocation4] sm:$0x7]
        %v338 = vmul.f32 %v337, %v331
        %v339 = vsel %vm226, %v338, 0.0
        %v340 = vrot.slane %v339, 4
        %v341 = vadd.f32 %v339, %v340
        %v342 = vrot.slane %v341, 2
        %v343 = vadd.f32 %v341, %v342
        %v344 = vrot.slane %v343, 1
        %v345 = vadd.f32 %v343, %v344
        %v346 = vmul.f32 %v310, %v310
        %v347 = vmul.f32 %v346, 128.0
        %v348 = vsub.f32 %v336, %v347
        %v349 = vmul.f32 %v312, %v312
        %v350 = vmul.f32 %v349, 128.0
        %v351 = vsub.f32 %v345, %v350
        %v352 = vadd.f32 %v324, 1.1920929e-07
        %v353 = vadd.f32 %v351, 1.1920929e-07
        %v354 = vperm.slane %v353, 0
        %v355 = vrcp.pop %v354
        %v356 = vmul.f32 %v354, %v355
        %v357 = vsub.f32 1.0, %v356
        %v358 = vmul.f32 %v355, %v357
        %v359 = vadd.f32 %v355, %v358
        %vm360 = vweird.f32 %v354
        %vm361 = vweird.f32 %v355
        %vm362 = vmor %vm360, %vm361
        %v363 = vsel %vm362, %v355, %v359
        %v364 = vand.u32 2147483647, %v354
        %vm365 = vcmp.eq.f32.partialorder %v364, 8.507059e+37
        %v366 = vand.u32 %v354, 2147483648
        %v367 = vor.u32 1.1754944e-38, %v366
        %v368 = vsel %vm365, %v367, %v363
        %v369 = vmul.f32 %v352, %v368
        %v370 = vmul.f32 %v369, %v369
        %v371 = vperm.slane %v351, 0
        %v372 = vmul.f32 %v370, %v371
        %v373 = vadd.f32 %v372, 1.1920929e-07
        %v374 = vmul.f32 %v369, 2.0
        %v375 = vmul.f32 %v374, %v324
        %v376 = vsub.f32 %v372, %v375
        %378 = vset.pattern.permute.xlu0 0
        %379 = vperm.xlu0 %378, %v348
        %v380 = vpop.permute.xlu0 %379
        %v382 = vadd.f32 %v376, %v380
        %v383 = vadd.f32 %v382, 1.1920929e-07
        %v384 = vrcp.pop %v383
        %v385 = vmul.f32 %v383, %v384
        %v386 = vsub.f32 1.0, %v385
        %v387 = vmul.f32 %v384, %v386
        %v388 = vadd.f32 %v384, %v387
        %vm389 = vweird.f32 %v383
        %vm390 = vweird.f32 %v384
        %vm391 = vmor %vm389, %vm390
        %v392 = vsel %vm391, %v384, %v388
        %v393 = vand.u32 2147483647, %v383
        %vm394 = vcmp.eq.f32.partialorder %v393, 8.507059e+37
        %v395 = vand.u32 %v383, 2147483648
        %v396 = vor.u32 1.1754944e-38, %v395
        %v397 = vsel %vm394, %v396, %v392
        %v398 = vmul.f32 %v373, %v397
        %v399 = vlog2.pop %v398
        %v400 = vmul.f32 %v399, 0.6931472
        %v401 = vmul.f32 %v400, 4.3429446
        %v402 = vmin.f32 %v401, 30.0
        %403 = vst.msk [vmem:[%s189] sm:$0x7] %vm226, %v402
      $region36: #{tpu_custom_call.1} parent=27 // pred_fallthru
        _
      %p404 = scmp.lt.s32.totalorder %s17, 1
      %s405 = scalar_select %p404, %s17, 1
      %s406 = smul.addr %s405, 4
      %s407 = scalar_lea.vmem %s2, %s406
      // Predicated region
      $region37: #{tpu_custom_call.1} parent=27 // pred_check
        %p408 = pneg %p99
      $region38: #{tpu_custom_call.1} parent=27 // pred_check_branch
        %410 = sbr.rel (%p408) target = $region40
      $region39: #{tpu_custom_call.1} parent=27 // pred_region
        _
      $region40: #{tpu_custom_call.1} parent=27 // pred_fallthru
        _
    $region28: #{tpu_custom_call.1} parent=5 // pred_fallthru
      _
    %p411 = scmp.le.s32.totalorder 2, %s8
    // Predicated region
    $region41: #{tpu_custom_call.1} parent=5 // pred_check
      %p412 = pneg %p411
    $region42: #{tpu_custom_call.1} parent=5 // pred_check_branch
      %414 = sbr.rel (%p412) target = $region44
    $region43: #{tpu_custom_call.1} parent=5 // pred_region
      %s415 = ssub.s32 %s8, 2
      // Predicated region
      $region45: #{tpu_custom_call.1} parent=43 // pred_check
        %p416 = pneg %p105
      $region46: #{tpu_custom_call.1} parent=43 // pred_check_branch
        %418 = sbr.rel (%p416) target = $region48
      $region47: #{tpu_custom_call.1} parent=43 // pred_region
        %p419 = scmp.lt.s32.totalorder %s19, 1
        %s420 = scalar_select %p419, %s19, 1
        %s421 = smul.addr %s420, 4
        %s422 = scalar_lea.vmem %s2, %s421
      $region48: #{tpu_custom_call.1} parent=43 // pred_fallthru
        _
    $region44: #{tpu_custom_call.1} parent=5 // pred_fallthru
      _
  $region6: #{tpu_custom_call.1} parent=0 // loop_footer
    %s12 = sadd.s32 1, %s8
  $region7: #{tpu_custom_call.1} parent=0 // loop_footer_branch
    %7 = sbr.rel target = $region3
  $region8: #{tpu_custom_call.1} parent=0 // loop_exit
    _

</llo_original>
